<compile_context>
chip_gen: v6e
topology: v6e:2x2x1
jax: 0.10.0
libtpu: 0.0.40
codegen_flags: <defaults>
</compile_context>

<pallas_src>
import functools

import jax
import jax.numpy as jnp
from jax.experimental import pallas as pl
from jax.experimental.pallas import tpu as pltpu

_IN_FEATURES = 28 * 28      # 784
_OUT_FEATURES = 10
_N_PAD = 128                # one full 128-lane vreg -> lane-dense MXU tile
_NEG_BIG = -1e30            # finite "-inf" for padded logit lanes


def _net_kernel(x_ref, w_ref, b_ref, o_ref):
    # x_ref: (TB, 784)  w_ref: (784, 128)  b_ref: (1, 128)  o_ref: (TB, 10)
    logits = jnp.dot(
        x_ref[...], w_ref[...], preferred_element_type=jnp.float32
    ) + b_ref[...]                                             # (TB, 128) f32
    # Padded lanes hold ~-1e30 (zero weight cols + huge negative bias), so
    # they never win the max and exp() underflows to 0 in the sum.
    m = jnp.max(logits, axis=-1, keepdims=True)                # (TB, 1)
    shifted = logits - m
    lse = jnp.log(jnp.sum(jnp.exp(shifted), axis=-1, keepdims=True))
    # Store only the 10 real classes; writeback is a tiny contiguous chunk.
    o_ref[...] = (shifted[:, :_OUT_FEATURES] - lse).astype(o_ref.dtype)


def prepare_params(w, b):
    """Pad Linear(784->10) params to a lane-dense (784,128)/(1,128) layout.

    Call once at init so no padding/copies sit on the per-step hot path.
    Padded weight columns are zero; padded bias lanes get a large negative
    value so the extra logit lanes never affect the log-sum-exp.
    """
    w = jnp.asarray(w, jnp.float32)
    b = jnp.asarray(b, jnp.float32)
    w_p = (
        jnp.zeros((_IN_FEATURES, _N_PAD), jnp.float32)
        .at[:, :_OUT_FEATURES].set(w)
    )
    b_p = (
        jnp.full((1, _N_PAD), _NEG_BIG, jnp.float32)
        .at[:, :_OUT_FEATURES].set(b.reshape(1, _OUT_FEATURES))
    )
    return w_p, b_p


def _pick_tile(bsz, block_b):
    """Batch tile: big tiles to amortize per-step overhead; >=2 steps when
    the whole batch would otherwise be a single step (v7x megacore)."""
    if bsz > block_b:
        return block_b
    if bsz >= 32:
        half = -(-bsz // 2)                      # ceil(bsz / 2)
        tb = ((half + 15) // 16) * 16            # multiple of 16 (bf16 packing)
        return min(tb, block_b)
    # Tiny batch: single full-array block (block dims == array dims is legal).
    return bsz


@functools.partial(jax.jit, static_argnames=("block_b",))
def net_forward(x, w_p, b_p, block_b=2048):
    """Pallas equivalent of Net.forward.

    x   : (B, 1, 28, 28) or any shape whose trailing dims flatten to 784.
          Fed to the kernel in its native dtype (f32 or bf16).
    w_p : (784, 128)  pre-padded weight (see prepare_params)
    b_p : (1, 128)    pre-padded bias
    returns (B, 10) float32 log-probabilities.
    """
    x_flat = x.reshape(-1, _IN_FEATURES)                       # x.view(-1, 784)
    bsz = x_flat.shape[0]

    tb = _pick_tile(bsz, block_b)
    grid = (pl.cdiv(bsz, tb),)

    out = pl.pallas_call(
        _net_kernel,
        out_shape=jax.ShapeDtypeStruct((bsz, _OUT_FEATURES), jnp.float32),
        grid=grid,
        in_specs=[
            pl.BlockSpec((tb, _IN_FEATURES), lambda i: (i, 0)),      # x: tiled
            pl.BlockSpec((_IN_FEATURES, _N_PAD), lambda i: (0, 0)),  # w: resident
            pl.BlockSpec((1, _N_PAD), lambda i: (0, 0)),             # b: resident
        ],
        out_specs=pl.BlockSpec((tb, _OUT_FEATURES), lambda i: (i, 0)),
        compiler_params=pltpu.CompilerParams(
            dimension_semantics=("parallel",),
            vmem_limit_bytes=32 * 1024 * 1024,
        ),
        cost_estimate=pl.CostEstimate(
            flops=2 * bsz * _IN_FEATURES * _N_PAD,
            transcendentals=bsz * _N_PAD,
            bytes_accessed=(
                bsz * _IN_FEATURES * x_flat.dtype.itemsize     # x read
                + _IN_FEATURES * _N_PAD * 4                    # padded weights
                + _N_PAD * 4                                   # padded bias
                + bsz * _OUT_FEATURES * 4                      # (B, 10) output
            ),
        ),
    )(x_flat, w_p, b_p)

    return out


def _reference(x, w, b):
    # Pure-JAX reference for correctness checking.
    x_flat = x.reshape(-1, _IN_FEATURES).astype(jnp.float32)
    logits = x_flat @ w + b
    return jax.nn.log_softmax(logits, axis=1)


if __name__ == "__main__":
    key = jax.random.PRNGKey(0)
    kx, kw, kb = jax.random.split(key, 3)

    # Deterministic synthetic parameters (nn.Linear(784, 10) shapes).
    fan_in = _IN_FEATURES
    bound = 1.0 / (fan_in ** 0.5)
    w = jax.random.uniform(kw, (fan_in, _OUT_FEATURES), jnp.float32, -bound, bound)
    b = jax.random.uniform(kb, (_OUT_FEATURES,), jnp.float32, -bound, bound)

    # Small MNIST-like input batch, NCHW as in PyTorch.
    x = jax.random.normal(kx, (2, 1, 28, 28), jnp.float32)

    w_p, b_p = prepare_params(w, b)
    out = net_forward(x, w_p, b_p)
    out = jax.block_until_ready(out)

    ref = _reference(x, w, b)
    assert out.shape == (2, _OUT_FEATURES)
    assert jnp.allclose(out, ref, atol=1e-5, rtol=1e-5), "mismatch vs reference"

    # Also exercise the multi-step (megacore-split) path with a mid-size batch.
    x_big = jax.random.normal(kx, (260, 1, 28, 28), jnp.float32)
    out_big = jax.block_until_ready(net_forward(x_big, w_p, b_p))
    ref_big = _reference(x_big, w, b)
    assert out_big.shape == (260, _OUT_FEATURES)
    assert jnp.allclose(out_big, ref_big, atol=1e-5, rtol=1e-5), "mismatch (big batch)"

    print("KERNEL_OK")
</pallas_src>

<mosaic_0001>
module attributes {stable_mosaic.version = 11 : i64} {
  func.func @_net_kernel(%arg0: i32, %arg1: memref<2x784xf32, #tpu.memory_space<vmem>>, %arg2: memref<784x128xf32, #tpu.memory_space<vmem>>, %arg3: memref<1x128xf32, #tpu.memory_space<vmem>>, %arg4: memref<2x10xf32, #tpu.memory_space<vmem>>) attributes {dimension_semantics = [#tpu.dimension_semantics<parallel>], iteration_bounds = array<i64: 1>, scalar_prefetch = 0 : i64, scratch_operands = 0 : i64, tpu.core_type = #tpu.core_type<tc>, window_params = [{transform_indices = @transform_0, window_bounds = array<i64: 2, 784>}, {pipeline_mode = #tpu.pipeline_mode<synchronous>, transform_indices = @transform_1, window_bounds = array<i64: 784, 128>}, {pipeline_mode = #tpu.pipeline_mode<synchronous>, transform_indices = @transform_2, window_bounds = array<i64: 1, 128>}, {transform_indices = @transform_3, window_bounds = array<i64: 2, 10>}]} {
    %c0 = arith.constant 0 : index
    %c0_0 = arith.constant 0 : index
    %0 = vector.load %arg1[%c0, %c0_0] : memref<2x784xf32, #tpu.memory_space<vmem>>, vector<2x784xf32>
    %c0_1 = arith.constant 0 : index
    %c0_2 = arith.constant 0 : index
    %1 = vector.load %arg2[%c0_1, %c0_2] : memref<784x128xf32, #tpu.memory_space<vmem>>, vector<784x128xf32>
    %cst = arith.constant dense<0.000000e+00> : vector<2x128xf32>
    %2 = tpu.matmul %0, %1, %cst {dimension_numbers = #tpu.dot_dimension_numbers<[1], [0], [0], [1], [0, 0, 1, 1], [], []>} : vector<2x784xf32>, vector<784x128xf32>, vector<2x128xf32> -> vector<2x128xf32>
    %c0_3 = arith.constant 0 : index
    %c0_4 = arith.constant 0 : index
    %3 = vector.load %arg3[%c0_3, %c0_4] : memref<1x128xf32, #tpu.memory_space<vmem>>, vector<1x128xf32>
    %4 = vector.broadcast %3 : vector<1x128xf32> to vector<2x128xf32>
    %5 = arith.addf %2, %4 : vector<2x128xf32>
    %cst_5 = arith.constant dense<0xFF800000> : vector<2xf32>
    %6 = vector.multi_reduction <maximumf>, %5, %cst_5 [1] : vector<2x128xf32> to vector<2xf32>
    %7 = vector.shape_cast %6 : vector<2xf32> to vector<2x1xf32>
    %8 = vector.broadcast %7 : vector<2x1xf32> to vector<2x128xf32>
    %9 = arith.subf %5, %8 : vector<2x128xf32>
    %10 = math.exp %9 : vector<2x128xf32>
    %cst_6 = arith.constant dense<0.000000e+00> : vector<2xf32>
    %11 = vector.multi_reduction <add>, %10, %cst_6 [1] : vector<2x128xf32> to vector<2xf32>
    %12 = vector.shape_cast %11 : vector<2xf32> to vector<2x1xf32>
    %13 = math.log %12 : vector<2x1xf32>
    %14 = vector.extract_strided_slice %9 {offsets = [0, 0], sizes = [2, 10], strides = [1, 1]} : vector<2x128xf32> to vector<2x10xf32>
    %15 = vector.broadcast %13 : vector<2x1xf32> to vector<2x10xf32>
    %16 = arith.subf %14, %15 : vector<2x10xf32>
    %c0_7 = arith.constant 0 : index
    %c0_8 = arith.constant 0 : index
    %17 = vector.load %arg4[%c0_7, %c0_8] : memref<2x10xf32, #tpu.memory_space<vmem>>, vector<2x10xf32>
    tpu.vector_store %arg4[%c0_7, %c0_8], %16 {strides = array<i32>} : memref<2x10xf32, #tpu.memory_space<vmem>>, vector<2x10xf32>,
    return
  }
  func.func @transform_0(%arg0: i32) -> (i32, i32) {
    %c0_i32 = arith.constant 0 : i32
    %c0_i32_0 = arith.constant 0 : i32
    return %arg0, %c0_i32 : i32, i32
  }
  func.func @transform_1(%arg0: i32) -> (i32, i32) {
    %c0_i32 = arith.constant 0 : i32
    %c0_i32_0 = arith.constant 0 : i32
    %c0_i32_1 = arith.constant 0 : i32
    return %c0_i32, %c0_i32_0 : i32, i32
  }
  func.func @transform_2(%arg0: i32) -> (i32, i32) {
    %c0_i32 = arith.constant 0 : i32
    %c0_i32_0 = arith.constant 0 : i32
    %c0_i32_1 = arith.constant 0 : i32
    return %c0_i32, %c0_i32_0 : i32, i32
  }
  func.func @transform_3(%arg0: i32) -> (i32, i32) {
    %c0_i32 = arith.constant 0 : i32
    %c0_i32_0 = arith.constant 0 : i32
    return %arg0, %c0_i32 : i32, i32
  }
}

</mosaic_0001>

<llo_original>
// kernel: net_forward.1
$region0: #{net_forward.1}
  #allocation0 [shape = 'u32[]', space=smem, size = 0x4, offset = 0x4, fixed_abs, tag = 'smem constant byte address 0x4 - core index']
  #allocation1 [shape = 'u32[144,128]{1,0:T(1,128)}', space=vmem, size = 0x12000, scoped, tag = 'internal scratch']
  %s0 = inlined_call_operand.vmem [shape: f32[2,784], index: 0, kind: input, shape index: {}]
  %s1 = inlined_call_operand.hbm [shape: f32[784,128], index: 1, kind: input, shape index: {}]
  %s2 = inlined_call_operand.vmem [shape: f32[1,128], index: 2, kind: input, shape index: {}]
  %s3 = inlined_call_operand.hbm [shape: f32[2,10], index: 3, kind: output, shape index: {}]
  %s4 = sld [smem:[#allocation0]]
  $region26: #{net_forward.1} parent=0
    _
  %s6 = ssub.s32 1, %s4
  %s7 = scalar_select 0, %s6, %s4
  $region1: #{net_forward.1} parent=0
    #allocation2 [shape = 'u8[401408]{0}', space=vmem, size = 0x62000, scoped, tag = 'input window, operand 1, single buffered']
    #allocation3 [shape = 's32[1]{0}', space=sflag, size = 0x4, scoped, tag = 'scoped memory for net_forward.1']
    #allocation4 [shape = 's32[1]{0}', space=sflag, size = 0x4, scoped, tag = 'scoped memory for net_forward.1']
    #allocation5 [shape = 'u8[1024]{0}', space=vmem, size = 0x400, scoped, tag = 'output window, operand 0, single buffered']
    %8 = vsyncpa [#allocation3], 0
    %9 = vsyncpa [#allocation4], 0
    // Predicated region
    $region2: #{net_forward.1} parent=1 // pred_check
      _
    $region3: #{net_forward.1} parent=1 // pred_check_branch
      %11 = sbr.rel (0) target = $region5
    $region4: #{net_forward.1} parent=1 // pred_region
      _
    $region5: #{net_forward.1} parent=1 // pred_fallthru
      _
    // Predicated region
    $region6: #{net_forward.1} parent=1 // pred_check
      _
    $region7: #{net_forward.1} parent=1 // pred_check_branch
      %13 = sbr.rel (0) target = $region9
    $region8: #{net_forward.1} parent=1 // pred_region
      %s15 = ssub.s32 12544, 12544
      %16 = vsyncadd [#allocation3], %s15
      %s17 = sshll.u32 [#allocation2], 4
      %s18 = int_to_ptr.vmem [resolvable:$true] %s17
      %23 = dma.hbm_to_vmem [thread:$0]  %s1, 12544, %s18, [#allocation3], 128, 128, 8
    $region9: #{net_forward.1} parent=1 // pred_fallthru
      _
    // Predicated region
    $region10: #{net_forward.1} parent=1 // pred_check
      _
    $region11: #{net_forward.1} parent=1 // pred_check_branch
      %25 = sbr.rel (0) target = $region13
    $region12: #{net_forward.1} parent=1 // pred_region
      _
    $region13: #{net_forward.1} parent=1 // pred_fallthru
      _
    // Predicated region
    $region14: #{net_forward.1} parent=1 // pred_check
      _
    $region15: #{net_forward.1} parent=1 // pred_check_branch
      %27 = sbr.rel (0) target = $region17
    $region16: #{net_forward.1} parent=1 // pred_region
      %28 = dma.done [#allocation3], 12544
    $region17: #{net_forward.1} parent=1 // pred_fallthru
      _
    %v29 = vld [vmem:[%s0] sm:$0xff]
    %v30 = vld [vmem:[%s0 + $0x8] sm:$0x3f]
    %v31 = vld [vmem:[#allocation2] sm:$0xff]
    %v32 = vld [vmem:[#allocation2 + $0x8] sm:$0xff]
    %v33 = vld [vmem:[#allocation2 + $0x10] sm:$0xff]
    %v34 = vld [vmem:[#allocation2 + $0x18] sm:$0xff]
    %v35 = vld [vmem:[#allocation2 + $0x20] sm:$0xff]
    %v36 = vld [vmem:[#allocation2 + $0x28] sm:$0xff]
    %v37 = vld [vmem:[#allocation2 + $0x30] sm:$0xff]
    %v38 = vld [vmem:[#allocation2 + $0x38] sm:$0xff]
    %v39 = vld [vmem:[#allocation2 + $0x40] sm:$0xff]
    %v40 = vld [vmem:[#allocation2 + $0x48] sm:$0xff]
    %v41 = vld [vmem:[#allocation2 + $0x50] sm:$0xff]
    %v42 = vld [vmem:[#allocation2 + $0x58] sm:$0xff]
    %v43 = vld [vmem:[#allocation2 + $0x60] sm:$0xff]
    %v44 = vld [vmem:[#allocation2 + $0x68] sm:$0xff]
    %v45 = vld [vmem:[#allocation2 + $0x70] sm:$0xff]
    %v46 = vld [vmem:[#allocation2 + $0x78] sm:$0xff]
    %v47 = vld [vmem:[#allocation2 + $0x80] sm:$0xff]
    %v48 = vld [vmem:[#allocation2 + $0x88] sm:$0xff]
    %v49 = vld [vmem:[#allocation2 + $0x90] sm:$0xff]
    %v50 = vld [vmem:[#allocation2 + $0x98] sm:$0xff]
    %v51 = vld [vmem:[#allocation2 + $0xa0] sm:$0xff]
    %v52 = vld [vmem:[#allocation2 + $0xa8] sm:$0xff]
    %v53 = vld [vmem:[#allocation2 + $0xb0] sm:$0xff]
    %v54 = vld [vmem:[#allocation2 + $0xb8] sm:$0xff]
    %v55 = vld [vmem:[#allocation2 + $0xc0] sm:$0xff]
    %v56 = vld [vmem:[#allocation2 + $0xc8] sm:$0xff]
    %v57 = vld [vmem:[#allocation2 + $0xd0] sm:$0xff]
    %v58 = vld [vmem:[#allocation2 + $0xd8] sm:$0xff]
    %v59 = vld [vmem:[#allocation2 + $0xe0] sm:$0xff]
    %v60 = vld [vmem:[#allocation2 + $0xe8] sm:$0xff]
    %v61 = vld [vmem:[#allocation2 + $0xf0] sm:$0xff]
    %v62 = vld [vmem:[#allocation2 + $0xf8] sm:$0xff]
    %v63 = vld [vmem:[#allocation2 + $0x100] sm:$0xff]
    %v64 = vld [vmem:[#allocation2 + $0x108] sm:$0xff]
    %v65 = vld [vmem:[#allocation2 + $0x110] sm:$0xff]
    %v66 = vld [vmem:[#allocation2 + $0x118] sm:$0xff]
    %v67 = vld [vmem:[#allocation2 + $0x120] sm:$0xff]
    %v68 = vld [vmem:[#allocation2 + $0x128] sm:$0xff]
    %v69 = vld [vmem:[#allocation2 + $0x130] sm:$0xff]
    %v70 = vld [vmem:[#allocation2 + $0x138] sm:$0xff]
    %v71 = vld [vmem:[#allocation2 + $0x140] sm:$0xff]
    %v72 = vld [vmem:[#allocation2 + $0x148] sm:$0xff]
    %v73 = vld [vmem:[#allocation2 + $0x150] sm:$0xff]
    %v74 = vld [vmem:[#allocation2 + $0x158] sm:$0xff]
    %v75 = vld [vmem:[#allocation2 + $0x160] sm:$0xff]
    %v76 = vld [vmem:[#allocation2 + $0x168] sm:$0xff]
    %v77 = vld [vmem:[#allocation2 + $0x170] sm:$0xff]
    %v78 = vld [vmem:[#allocation2 + $0x178] sm:$0xff]
    %v79 = vld [vmem:[#allocation2 + $0x180] sm:$0xff]
    %v80 = vld [vmem:[#allocation2 + $0x188] sm:$0xff]
    %v81 = vld [vmem:[#allocation2 + $0x190] sm:$0xff]
    %v82 = vld [vmem:[#allocation2 + $0x198] sm:$0xff]
    %v83 = vld [vmem:[#allocation2 + $0x1a0] sm:$0xff]
    %v84 = vld [vmem:[#allocation2 + $0x1a8] sm:$0xff]
    %v85 = vld [vmem:[#allocation2 + $0x1b0] sm:$0xff]
    %v86 = vld [vmem:[#allocation2 + $0x1b8] sm:$0xff]
    %v87 = vld [vmem:[#allocation2 + $0x1c0] sm:$0xff]
    %v88 = vld [vmem:[#allocation2 + $0x1c8] sm:$0xff]
    %v89 = vld [vmem:[#allocation2 + $0x1d0] sm:$0xff]
    %v90 = vld [vmem:[#allocation2 + $0x1d8] sm:$0xff]
    %v91 = vld [vmem:[#allocation2 + $0x1e0] sm:$0xff]
    %v92 = vld [vmem:[#allocation2 + $0x1e8] sm:$0xff]
    %v93 = vld [vmem:[#allocation2 + $0x1f0] sm:$0xff]
    %v94 = vld [vmem:[#allocation2 + $0x1f8] sm:$0xff]
    %v95 = vld [vmem:[#allocation2 + $0x200] sm:$0xff]
    %v96 = vld [vmem:[#allocation2 + $0x208] sm:$0xff]
    %v97 = vld [vmem:[#allocation2 + $0x210] sm:$0xff]
    %v98 = vld [vmem:[#allocation2 + $0x218] sm:$0xff]
    %v99 = vld [vmem:[#allocation2 + $0x220] sm:$0xff]
    %v100 = vld [vmem:[#allocation2 + $0x228] sm:$0xff]
    %v101 = vld [vmem:[#allocation2 + $0x230] sm:$0xff]
    %v102 = vld [vmem:[#allocation2 + $0x238] sm:$0xff]
    %v103 = vld [vmem:[#allocation2 + $0x240] sm:$0xff]
    %v104 = vld [vmem:[#allocation2 + $0x248] sm:$0xff]
    %v105 = vld [vmem:[#allocation2 + $0x250] sm:$0xff]
    %v106 = vld [vmem:[#allocation2 + $0x258] sm:$0xff]
    %v107 = vld [vmem:[#allocation2 + $0x260] sm:$0xff]
    %v108 = vld [vmem:[#allocation2 + $0x268] sm:$0xff]
    %v109 = vld [vmem:[#allocation2 + $0x270] sm:$0xff]
    %v110 = vld [vmem:[#allocation2 + $0x278] sm:$0xff]
    %v111 = vld [vmem:[#allocation2 + $0x280] sm:$0xff]
    %v112 = vld [vmem:[#allocation2 + $0x288] sm:$0xff]
    %v113 = vld [vmem:[#allocation2 + $0x290] sm:$0xff]
    %v114 = vld [vmem:[#allocation2 + $0x298] sm:$0xff]
    %v115 = vld [vmem:[#allocation2 + $0x2a0] sm:$0xff]
    %v116 = vld [vmem:[#allocation2 + $0x2a8] sm:$0xff]
    %v117 = vld [vmem:[#allocation2 + $0x2b0] sm:$0xff]
    %v118 = vld [vmem:[#allocation2 + $0x2b8] sm:$0xff]
    %v119 = vld [vmem:[#allocation2 + $0x2c0] sm:$0xff]
    %v120 = vld [vmem:[#allocation2 + $0x2c8] sm:$0xff]
    %v121 = vld [vmem:[#allocation2 + $0x2d0] sm:$0xff]
    %v122 = vld [vmem:[#allocation2 + $0x2d8] sm:$0xff]
    %v123 = vld [vmem:[#allocation2 + $0x2e0] sm:$0xff]
    %v124 = vld [vmem:[#allocation2 + $0x2e8] sm:$0xff]
    %v125 = vld [vmem:[#allocation2 + $0x2f0] sm:$0xff]
    %v126 = vld [vmem:[#allocation2 + $0x2f8] sm:$0xff]
    %v127 = vld [vmem:[#allocation2 + $0x300] sm:$0xff]
    %v128 = vld [vmem:[#allocation2 + $0x308] sm:$0xff]
    %v129 = vld [vmem:[%s2] sm:$0x1]
    %v131 = vlaneseq
    %v132 = vshrl.u32 %v131, 7
    %v133 = vsub.s32 0, %v132
    %v134 = vrot.slane %v129, %v133
    %v138 = vcombine.high %v29, %v29
    %v140 = vunpack.c.l.s4 1983009808
    %v141 = vunpack.c.0.s8 %v140
    %v142 = vlaneseq
    %v143 = vshrl.u32 %v142, 7
    %v144 = vsub.s32 %v141, %v143
    %v145 = vrot.slane %v29, %v144
    %v147 = vunpack.c.l.s4 1983009808
    %v148 = vunpack.c.0.s8 %v147
    %v149 = vlaneseq
    %v150 = vshrl.u32 %v149, 7
    %v151 = vsub.s32 %v148, %v150
    %v152 = vrot.slane %v138, %v151
    %v153 = vcombine.high %v145, %v145
    %v154 = vcombine.high %v152, %v152
    %v155 = vcombine.high %v30, %v30
    %v157 = vunpack.c.l.s4 1983009808
    %v158 = vunpack.c.0.s8 %v157
    %v159 = vlaneseq
    %v160 = vshrl.u32 %v159, 7
    %v161 = vsub.s32 %v158, %v160
    %v162 = vrot.slane %v30, %v161
    %v164 = vunpack.c.l.s4 1983009808
    %v165 = vunpack.c.0.s8 %v164
    %v166 = vlaneseq
    %v167 = vshrl.u32 %v166, 7
    %v168 = vsub.s32 %v165, %v167
    %v169 = vrot.slane %v155, %v168
    %v170 = vcombine.high %v162, %v162
    %vm177 = vcmask 130048
    %v178 = vsel %vm177, %v169, 0
    %180 = vmatprep.subr.mxu0 0.0
    %181 = vmatpush1.msra.mxu0 %v46
    %182 = vmatprep.subr.mxu0 0.0
    %183 = vmatpush1.msra.mxu0 %v45
    %184 = vmatprep.subr.mxu0 0.0
    %185 = vmatpush1.msra.mxu0 %v44
    %186 = vmatprep.subr.mxu0 0.0
    %187 = vmatpush1.msra.mxu0 %v43
    %188 = vmatprep.subr.mxu0 0.0
    %189 = vmatpush1.msra.mxu0 %v42
    %190 = vmatprep.subr.mxu0 0.0
    %191 = vmatpush1.msra.mxu0 %v41
    %192 = vmatprep.subr.mxu0 0.0
    %193 = vmatpush1.msra.mxu0 %v40
    %194 = vmatprep.subr.mxu0 0.0
    %195 = vmatpush1.msra.mxu0 %v39
    %196 = vmatprep.subr.mxu0 0.0
    %197 = vmatpush1.msra.mxu0 %v38
    %198 = vmatprep.subr.mxu0 0.0
    %199 = vmatpush1.msra.mxu0 %v37
    %200 = vmatprep.subr.mxu0 0.0
    %201 = vmatpush1.msra.mxu0 %v36
    %202 = vmatprep.subr.mxu0 0.0
    %203 = vmatpush1.msra.mxu0 %v35
    %204 = vmatprep.subr.mxu0 0.0
    %205 = vmatpush1.msra.mxu0 %v34
    %206 = vmatprep.subr.mxu0 0.0
    %207 = vmatpush1.msra.mxu0 %v33
    %208 = vmatprep.subr.mxu0 0.0
    %209 = vmatpush1.msra.mxu0 %v32
    %210 = vmatprep.subr.mxu0 0.0
    %211 = vmatpush1.msra.mxu0 %v31
    %212 = vmatprep.subr.mxu0 0.0
    %213 = vmatpush2.msra.mxu0 %v62
    %214 = vmatprep.subr.mxu0 0.0
    %215 = vmatpush2.msra.mxu0 %v61
    %216 = vmatprep.subr.mxu0 0.0
    %217 = vmatpush2.msra.mxu0 %v60
    %218 = vmatprep.subr.mxu0 0.0
    %219 = vmatpush2.msra.mxu0 %v59
    %220 = vmatprep.subr.mxu0 0.0
    %221 = vmatpush2.msra.mxu0 %v58
    %222 = vmatprep.subr.mxu0 0.0
    %223 = vmatpush2.msra.mxu0 %v57
    %224 = vmatprep.subr.mxu0 0.0
    %225 = vmatpush2.msra.mxu0 %v56
    %226 = vmatprep.subr.mxu0 0.0
    %227 = vmatpush2.msra.mxu0 %v55
    %228 = vmatprep.subr.mxu0 0.0
    %229 = vmatpush2.msra.mxu0 %v54
    %230 = vmatprep.subr.mxu0 0.0
    %231 = vmatpush2.msra.mxu0 %v53
    %232 = vmatprep.subr.mxu0 0.0
    %233 = vmatpush2.msra.mxu0 %v52
    %234 = vmatprep.subr.mxu0 0.0
    %235 = vmatpush2.msra.mxu0 %v51
    %236 = vmatprep.subr.mxu0 0.0
    %237 = vmatpush2.msra.mxu0 %v50
    %238 = vmatprep.subr.mxu0 0.0
    %239 = vmatpush2.msra.mxu0 %v49
    %240 = vmatprep.subr.mxu0 0.0
    %241 = vmatpush2.msra.mxu0 %v48
    %242 = vmatprep.subr.mxu0 0.0
    %243 = vmatpush2.msra.mxu0 %v47
    %244 = vmatprep.mubr.f32.mxu0 %v153
    %245 = vmatmul.mubr.f32.gmra.mxu0 %v145
    %v246 = vpop.f32.mrf.mxu0
    %v247 = vadd.f32 %v134, %v246
    %v248 = vpop.f32.mrf.mxu0
    %249 = vdwg.mxu0
    %250 = vmatprep.subr.mxu0 0.0
    %251 = vmatpush1.msra.mxu0 %v78
    %252 = vmatprep.subr.mxu0 0.0
    %253 = vmatpush1.msra.mxu0 %v77
    %254 = vmatprep.subr.mxu0 0.0
    %255 = vmatpush1.msra.mxu0 %v76
    %256 = vmatprep.subr.mxu0 0.0
    %257 = vmatpush1.msra.mxu0 %v75
    %258 = vmatprep.subr.mxu0 0.0
    %259 = vmatpush1.msra.mxu0 %v74
    %260 = vmatprep.subr.mxu0 0.0
    %261 = vmatpush1.msra.mxu0 %v73
    %262 = vmatprep.subr.mxu0 0.0
    %263 = vmatpush1.msra.mxu0 %v72
    %264 = vmatprep.subr.mxu0 0.0
    %265 = vmatpush1.msra.mxu0 %v71
    %266 = vmatprep.subr.mxu0 0.0
    %267 = vmatpush1.msra.mxu0 %v70
    %268 = vmatprep.subr.mxu0 0.0
    %269 = vmatpush1.msra.mxu0 %v69
    %270 = vmatprep.subr.mxu0 0.0
    %271 = vmatpush1.msra.mxu0 %v68
    %272 = vmatprep.subr.mxu0 0.0
    %273 = vmatpush1.msra.mxu0 %v67
    %274 = vmatprep.subr.mxu0 0.0
    %275 = vmatpush1.msra.mxu0 %v66
    %276 = vmatprep.subr.mxu0 0.0
    %277 = vmatpush1.msra.mxu0 %v65
    %278 = vmatprep.subr.mxu0 0.0
    %279 = vmatpush1.msra.mxu0 %v64
    %280 = vmatprep.subr.mxu0 0.0
    %281 = vmatpush1.msra.mxu0 %v63
    %282 = vmatprep.subr.mxu0 0.0
    %283 = vmatpush2.msra.mxu0 %v94
    %284 = vmatprep.subr.mxu0 0.0
    %285 = vmatpush2.msra.mxu0 %v93
    %286 = vmatprep.subr.mxu0 0.0
    %287 = vmatpush2.msra.mxu0 %v92
    %288 = vmatprep.subr.mxu0 0.0
    %289 = vmatpush2.msra.mxu0 %v91
    %290 = vmatprep.subr.mxu0 0.0
    %291 = vmatpush2.msra.mxu0 %v90
    %292 = vmatprep.subr.mxu0 0.0
    %293 = vmatpush2.msra.mxu0 %v89
    %294 = vmatprep.subr.mxu0 0.0
    %295 = vmatpush2.msra.mxu0 %v88
    %296 = vmatprep.subr.mxu0 0.0
    %297 = vmatpush2.msra.mxu0 %v87
    %298 = vmatprep.subr.mxu0 0.0
    %299 = vmatpush2.msra.mxu0 %v86
    %300 = vmatprep.subr.mxu0 0.0
    %301 = vmatpush2.msra.mxu0 %v85
    %302 = vmatprep.subr.mxu0 0.0
    %303 = vmatpush2.msra.mxu0 %v84
    %304 = vmatprep.subr.mxu0 0.0
    %305 = vmatpush2.msra.mxu0 %v83
    %306 = vmatprep.subr.mxu0 0.0
    %307 = vmatpush2.msra.mxu0 %v82
    %308 = vmatprep.subr.mxu0 0.0
    %309 = vmatpush2.msra.mxu0 %v81
    %310 = vmatprep.subr.mxu0 0.0
    %311 = vmatpush2.msra.mxu0 %v80
    %312 = vmatprep.subr.mxu0 0.0
    %313 = vmatpush2.msra.mxu0 %v79
    %314 = vmatprep.mubr.f32.mxu0 %v154
    %315 = vmatmul.mubr.f32.gmra.mxu0 %v152
    %v316 = vpop.f32.mrf.mxu0
    %v317 = vadd.f32 %v247, %v316
    %v318 = vpop.f32.mrf.mxu0
    %319 = vdwg.mxu0
    %320 = vmatprep.subr.mxu0 0.0
    %321 = vmatpush1.msra.mxu0 %v110
    %322 = vmatprep.subr.mxu0 0.0
    %323 = vmatpush1.msra.mxu0 %v109
    %324 = vmatprep.subr.mxu0 0.0
    %325 = vmatpush1.msra.mxu0 %v108
    %326 = vmatprep.subr.mxu0 0.0
    %327 = vmatpush1.msra.mxu0 %v107
    %328 = vmatprep.subr.mxu0 0.0
    %329 = vmatpush1.msra.mxu0 %v106
    %330 = vmatprep.subr.mxu0 0.0
    %331 = vmatpush1.msra.mxu0 %v105
    %332 = vmatprep.subr.mxu0 0.0
    %333 = vmatpush1.msra.mxu0 %v104
    %334 = vmatprep.subr.mxu0 0.0
    %335 = vmatpush1.msra.mxu0 %v103
    %336 = vmatprep.subr.mxu0 0.0
    %337 = vmatpush1.msra.mxu0 %v102
    %338 = vmatprep.subr.mxu0 0.0
    %339 = vmatpush1.msra.mxu0 %v101
    %340 = vmatprep.subr.mxu0 0.0
    %341 = vmatpush1.msra.mxu0 %v100
    %342 = vmatprep.subr.mxu0 0.0
    %343 = vmatpush1.msra.mxu0 %v99
    %344 = vmatprep.subr.mxu0 0.0
    %345 = vmatpush1.msra.mxu0 %v98
    %346 = vmatprep.subr.mxu0 0.0
    %347 = vmatpush1.msra.mxu0 %v97
    %348 = vmatprep.subr.mxu0 0.0
    %349 = vmatpush1.msra.mxu0 %v96
    %350 = vmatprep.subr.mxu0 0.0
    %351 = vmatpush1.msra.mxu0 %v95
    %352 = vmatprep.subr.mxu0 0.0
    %353 = vmatpush2.msra.mxu0 %v126
    %354 = vmatprep.subr.mxu0 0.0
    %355 = vmatpush2.msra.mxu0 %v125
    %356 = vmatprep.subr.mxu0 0.0
    %357 = vmatpush2.msra.mxu0 %v124
    %358 = vmatprep.subr.mxu0 0.0
    %359 = vmatpush2.msra.mxu0 %v123
    %360 = vmatprep.subr.mxu0 0.0
    %361 = vmatpush2.msra.mxu0 %v122
    %362 = vmatprep.subr.mxu0 0.0
    %363 = vmatpush2.msra.mxu0 %v121
    %364 = vmatprep.subr.mxu0 0.0
    %365 = vmatpush2.msra.mxu0 %v120
    %366 = vmatprep.subr.mxu0 0.0
    %367 = vmatpush2.msra.mxu0 %v119
    %368 = vmatprep.subr.mxu0 0.0
    %369 = vmatpush2.msra.mxu0 %v118
    %370 = vmatprep.subr.mxu0 0.0
    %371 = vmatpush2.msra.mxu0 %v117
    %372 = vmatprep.subr.mxu0 0.0
    %373 = vmatpush2.msra.mxu0 %v116
    %374 = vmatprep.subr.mxu0 0.0
    %375 = vmatpush2.msra.mxu0 %v115
    %376 = vmatprep.subr.mxu0 0.0
    %377 = vmatpush2.msra.mxu0 %v114
    %378 = vmatprep.subr.mxu0 0.0
    %379 = vmatpush2.msra.mxu0 %v113
    %380 = vmatprep.subr.mxu0 0.0
    %381 = vmatpush2.msra.mxu0 %v112
    %382 = vmatprep.subr.mxu0 0.0
    %383 = vmatpush2.msra.mxu0 %v111
    %384 = vmatprep.mubr.f32.mxu0 %v170
    %385 = vmatmul.mubr.f32.gmra.mxu0 %v162
    %v386 = vpop.f32.mrf.mxu0
    %v387 = vadd.f32 %v317, %v386
    %v388 = vpop.f32.mrf.mxu0
    %389 = vdwg.mxu0
    %390 = vmatprep.subr.mxu0 0.0
    %391 = vmatpush1.msra.mxu0 0.0
    %392 = vmatprep.subr.mxu0 0.0
    %393 = vmatpush1.msra.mxu0 0.0
    %394 = vmatprep.subr.mxu0 0.0
    %395 = vmatpush1.msra.mxu0 0.0
    %396 = vmatprep.subr.mxu0 0.0
    %397 = vmatpush1.msra.mxu0 0.0
    %398 = vmatprep.subr.mxu0 0.0
    %399 = vmatpush1.msra.mxu0 0.0
    %400 = vmatprep.subr.mxu0 0.0
    %401 = vmatpush1.msra.mxu0 0.0
    %402 = vmatprep.subr.mxu0 0.0
    %403 = vmatpush1.msra.mxu0 0.0
    %404 = vmatprep.subr.mxu0 0.0
    %405 = vmatpush1.msra.mxu0 0.0
    %406 = vmatprep.subr.mxu0 0.0
    %407 = vmatpush1.msra.mxu0 0.0
    %408 = vmatprep.subr.mxu0 0.0
    %409 = vmatpush1.msra.mxu0 0.0
    %410 = vmatprep.subr.mxu0 0.0
    %411 = vmatpush1.msra.mxu0 0.0
    %412 = vmatprep.subr.mxu0 0.0
    %413 = vmatpush1.msra.mxu0 0.0
    %414 = vmatprep.subr.mxu0 0.0
    %415 = vmatpush1.msra.mxu0 0.0
    %416 = vmatprep.subr.mxu0 0.0
    %417 = vmatpush1.msra.mxu0 0.0
    %418 = vmatprep.subr.mxu0 0.0
    %419 = vmatpush1.msra.mxu0 %v128
    %420 = vmatprep.subr.mxu0 0.0
    %421 = vmatpush1.msra.mxu0 %v127
    %422 = vmatprep.subr.mxu0 0.0
    %423 = vmatpush2.msra.mxu0 0.0
    %424 = vmatprep.subr.mxu0 0.0
    %425 = vmatpush2.msra.mxu0 0.0
    %426 = vmatprep.subr.mxu0 0.0
    %427 = vmatpush2.msra.mxu0 0.0
    %428 = vmatprep.subr.mxu0 0.0
    %429 = vmatpush2.msra.mxu0 0.0
    %430 = vmatprep.subr.mxu0 0.0
    %431 = vmatpush2.msra.mxu0 0.0
    %432 = vmatprep.subr.mxu0 0.0
    %433 = vmatpush2.msra.mxu0 0.0
    %434 = vmatprep.subr.mxu0 0.0
    %435 = vmatpush2.msra.mxu0 0.0
    %436 = vmatprep.subr.mxu0 0.0
    %437 = vmatpush2.msra.mxu0 0.0
    %438 = vmatprep.subr.mxu0 0.0
    %439 = vmatpush2.msra.mxu0 0.0
    %440 = vmatprep.subr.mxu0 0.0
    %441 = vmatpush2.msra.mxu0 0.0
    %442 = vmatprep.subr.mxu0 0.0
    %443 = vmatpush2.msra.mxu0 0.0
    %444 = vmatprep.subr.mxu0 0.0
    %445 = vmatpush2.msra.mxu0 0.0
    %446 = vmatprep.subr.mxu0 0.0
    %447 = vmatpush2.msra.mxu0 0.0
    %448 = vmatprep.subr.mxu0 0.0
    %449 = vmatpush2.msra.mxu0 0.0
    %450 = vmatprep.subr.mxu0 0.0
    %451 = vmatpush2.msra.mxu0 0.0
    %452 = vmatprep.subr.mxu0 0.0
    %453 = vmatpush2.msra.mxu0 0.0
    %454 = vmatprep.mubr.f32.mxu0 0.0
    %455 = vmatmul.mubr.f32.gmra.mxu0 %v178
    %v456 = vpop.f32.mrf.mxu0
    %v457 = vadd.f32 %v387, %v456
    %v458 = vpop.f32.mrf.mxu0
    %459 = vdwg.mxu0
    %vm460 = vcmask 1041408
    %v461 = vsel %vm460, %v457, -inf
    %462 = vmax.xlane.f32.xlu0 %v461
    %v463 = vpop.xlane.xlu0 %462
    %v464 = vsub.f32 %v457, %v463
    %v465 = vmul.f32 %v464, 1.442695
    %v466 = vpow.pop %v465
    %v467 = vsel %vm460, %v466, 0.0
    %468 = vadd.xlane.f32.xlu0 %v467
    %v469 = vpop.xlane.xlu0 %468
    %v470 = vlog2.pop %v469
    %v471 = vmul.f32 %v470, 0.6931472
    %v472 = vsub.f32 %v464, %v471
    %vm473 = vcmask 74752
    %474 = vst.msk [vmem:[#allocation5] sm:$0x3] %vm473, %v472
    // Predicated region
    $region18: #{net_forward.1} parent=1 // pred_check
      _
    $region19: #{net_forward.1} parent=1 // pred_check_branch
      %476 = sbr.rel (0) target = $region21
    $region20: #{net_forward.1} parent=1 // pred_region
      %s478 = ssub.s32 32, 32
      %479 = vsyncadd [#allocation4], %s478
      %s481 = sshll.u32 [#allocation5], 4
      %s482 = int_to_ptr.vmem [resolvable:$true] %s481
      %484 = dma.vmem_to_hbm [thread:$0]  %s482, 32, %s3, [#allocation4]
    $region21: #{net_forward.1} parent=1 // pred_fallthru
      _
    // Predicated region
    $region22: #{net_forward.1} parent=1 // pred_check
      _
    $region23: #{net_forward.1} parent=1 // pred_check_branch
      %486 = sbr.rel (0) target = $region25
    $region24: #{net_forward.1} parent=1 // pred_region
      %487 = dma.done [#allocation4], 32
    $region25: #{net_forward.1} parent=1 // pred_fallthru
      _
    %488 = vsyncpa [#allocation3], 1
    %489 = vsyncpa [#allocation4], 1

</llo_original>
